<compile_context>
chip_gen: v5e
topology: v5e:2x2
jax: 0.10.0
libtpu: 0.0.40
codegen_flags: <defaults>
</compile_context>

<pallas_src>
import math
from functools import partial

import numpy as np
import jax
import jax.numpy as jnp
from jax.experimental import pallas as pl
from jax.experimental.pallas import tpu as pltpu


# --------------------------------------------------------------------------
# Helpers
# --------------------------------------------------------------------------
def _round_up(x, m):
    return ((x + m - 1) // m) * m


def _cdiv(a, b):
    return (a + b - 1) // b


def _pick_tile_k(n):
    # Reduction tile (columns of A / rows of X).  Larger tiles amortize the
    # ~0.35us/step pipeline overhead and shrink secondary streams; bounded so
    # the double-buffered int8 A tile stays far inside v7x's 64 MiB VMEM.
    if n >= 8192:
        return 2048
    if n >= 2048:
        return 1024
    if n >= 1024:
        return 512
    if n >= 512:
        return 256
    return 128


def _pick_tile_m(n, tile_k):
    # Row tile.  Prefer an even row-tile count so the "parallel" row axis
    # load-balances across v7x's two TensorCores (a no-op on v5e/v6e, where
    # there is a single TC per chip).
    r0 = _cdiv(n, tile_k)
    if r0 % 2 == 0:
        return tile_k
    tm = max(32, _round_up(_cdiv(n, r0 + 1), 32))
    if _cdiv(n, tm) % 2 == 0:
        return tm
    return tile_k


# --------------------------------------------------------------------------
# Fused kernel: out = A @ (X @ W) + (1 + eps) * (X @ W)
#   grid = (rows/TM, reduction/TK), f32 VMEM accumulator, reduction axis last.
# --------------------------------------------------------------------------
def _gin_fused_kernel(a_ref, xk_ref, xi_ref, w_ref, o_ref, acc_ref, *, self_scale):
    k = pl.program_id(1)

    @pl.when(k == 0)
    def _init():
        # (1 + eps) * (X_i @ W) kept in f32 (single rounding for the self term).
        acc_ref[...] = self_scale * jnp.dot(
            xi_ref[...], w_ref[...], preferred_element_type=jnp.float32
        )

    # Neighbor contribution for this reduction tile: A_ik @ (X_k @ W).
    xw_k = jnp.dot(xk_ref[...], w_ref[...], preferred_element_type=jnp.float32)
    # int8 {0,1} adjacency -> bf16 for the MXU (via f32 for portable lowering).
    a_bf16 = a_ref[...].astype(jnp.float32).astype(jnp.bfloat16)
    acc_ref[...] += jnp.dot(
        a_bf16, xw_k.astype(jnp.bfloat16), preferred_element_type=jnp.float32
    )

    @pl.when(k == pl.num_programs(1) - 1)
    def _finalize():
        o_ref[...] = acc_ref[...].astype(o_ref.dtype)


def gin_forward(a_pad, xk_pad, xi_pad, w_pad, *, eps, tile_m, tile_k, out_dtype):
    n_rows, n_k = a_pad.shape
    din, dout_pad = w_pad.shape
    kernel = partial(_gin_fused_kernel, self_scale=float(1.0 + eps))
    return pl.pallas_call(
        kernel,
        out_shape=jax.ShapeDtypeStruct((n_rows, dout_pad), out_dtype),
        grid_spec=pltpu.PrefetchScalarGridSpec(
            num_scalar_prefetch=0,
            grid=(n_rows // tile_m, n_k // tile_k),
            in_specs=[
                # A tile for this (row, reduction) step (int8 {0,1}).
                pl.BlockSpec((tile_m, tile_k), lambda i, k: (i, k)),
                # X rows entering the contraction (indexed by k, narrow din).
                pl.BlockSpec((tile_k, din), lambda i, k: (k, 0)),
                # X rows for the (1+eps) self term (indexed by i, resident per row tile).
                pl.BlockSpec((tile_m, din), lambda i, k: (i, 0)),
                # W: constant block index -> fetched once, VMEM-resident.
                pl.BlockSpec((din, dout_pad), lambda i, k: (0, 0)),
            ],
            out_specs=pl.BlockSpec((tile_m, dout_pad), lambda i, k: (i, 0)),
            scratch_shapes=[pltpu.VMEM((tile_m, dout_pad), jnp.float32)],
        ),
        compiler_params=pltpu.CompilerParams(
            dimension_semantics=("parallel", "arbitrary"),
            vmem_limit_bytes=32 * 1024 * 1024,
        ),
    )(a_pad, xk_pad, xi_pad, w_pad)


# --------------------------------------------------------------------------
# GINConv module (JAX glue)
# --------------------------------------------------------------------------
class GINConvPallas:
    def __init__(self, input_dim, output_dim, key):
        # matches reset_parameters(): uniform(-stdv, stdv), stdv = 1/sqrt(output_dim)
        stdv = 1.0 / math.sqrt(output_dim)
        self.weights = jax.random.uniform(
            key, (input_dim, output_dim), jnp.float32, minval=-stdv, maxval=stdv
        )
        self.eplison = 0.5

    def __call__(self, X, row_pointers, column_index):
        n, din = X.shape
        dout = self.weights.shape[1]

        tile_k = _pick_tile_k(n)
        tile_m = _pick_tile_m(n, tile_k)
        n_pad_rows = _round_up(n, tile_m)
        n_pad_k = _round_up(n, tile_k)
        dout_pad = _round_up(dout, 128)  # lane-dense output stores

        # Dense {0,1} adjacency built directly at padded shape, in int8 storage,
        # with a single scatter-add (duplicate CSR edges count; exact up to 127
        # duplicates per (i, j) in int8).  Self term handled in-kernel.
        # TODO(synk): replace the O(N^2) densification + dense matmul with a
        #             scalar-prefetch CSR gather-accumulate kernel for large N.
        deg = row_pointers[1:] - row_pointers[:-1]
        row_ids = jnp.repeat(
            jnp.arange(n, dtype=jnp.int32),
            deg,
            total_repeat_length=column_index.shape[0],
        )
        a_pad = (
            jnp.zeros((n_pad_rows, n_pad_k), jnp.int8)
            .at[row_ids, column_index]
            .add(jnp.int8(1))
        )

        xb = X.astype(jnp.bfloat16)
        xk_pad = jnp.zeros((n_pad_k, din), jnp.bfloat16).at[:n].set(xb)
        xi_pad = jnp.zeros((n_pad_rows, din), jnp.bfloat16).at[:n].set(xb)
        w_pad = (
            jnp.zeros((din, dout_pad), jnp.bfloat16)
            .at[:, :dout]
            .set(self.weights.astype(jnp.bfloat16))
        )

        out_pad = gin_forward(
            a_pad,
            xk_pad,
            xi_pad,
            w_pad,
            eps=self.eplison,
            tile_m=tile_m,
            tile_k=tile_k,
            out_dtype=X.dtype,
        )
        return out_pad[:n, :dout]


# --------------------------------------------------------------------------
# Main
# --------------------------------------------------------------------------
if __name__ == "__main__":
    key = jax.random.PRNGKey(0)
    k_x, k_w, k_adj = jax.random.split(key, 3)

    n_nodes, in_dim, out_dim = 300, 32, 16  # non-multiple of 128 -> exercises padding

    # Node features
    X = jax.random.normal(k_x, (n_nodes, in_dim), jnp.float32)

    # Deterministic random sparse graph -> CSR (row_pointers, column_index)
    adj_mask = np.asarray(
        jax.random.bernoulli(k_adj, 0.05, (n_nodes, n_nodes))
    ).astype(np.int32)
    np.fill_diagonal(adj_mask, 0)  # self term handled by (1+eps)*X[i]
    row_pointers_np = np.zeros(n_nodes + 1, dtype=np.int32)
    row_pointers_np[1:] = np.cumsum(adj_mask.sum(axis=1))
    column_index_np = np.nonzero(adj_mask)[1].astype(np.int32)

    row_pointers = jnp.asarray(row_pointers_np)
    column_index = jnp.asarray(column_index_np)

    # Module + forward
    conv = GINConvPallas(in_dim, out_dim, k_w)
    out = conv(X, row_pointers, column_index)
    out = jax.block_until_ready(out)
    assert out.shape == (n_nodes, out_dim)

    # --- Reference checks (silent) -------------------------------------------
    A_f32 = jnp.asarray(adj_mask, jnp.float32)

    # (1) Tight check against the same mixed-precision arithmetic the kernel uses.
    Xb = X.astype(jnp.bfloat16)
    Wb = conv.weights.astype(jnp.bfloat16)
    xw_f32 = jnp.dot(Xb, Wb, preferred_element_type=jnp.float32)
    out_emul = (1.0 + conv.eplison) * xw_f32 + jnp.dot(
        A_f32.astype(jnp.bfloat16),
        xw_f32.astype(jnp.bfloat16),
        preferred_element_type=jnp.float32,
    )
    assert jnp.allclose(out, out_emul, atol=2e-2, rtol=2e-2)

    # (2) Loose check against the pure-f32 GIN semantics (bf16 inputs -> ~1% err).
    x_agg_ref = (1.0 + conv.eplison) * X + A_f32 @ X
    ref = x_agg_ref @ conv.weights
    assert jnp.allclose(out, ref, atol=1.5e-1, rtol=5e-2)

    print("KERNEL_OK")
</pallas_src>

<mosaic_0001>
module attributes {stable_mosaic.version = 11 : i64} {
  func.func @_gin_fused_kernel(%arg0: i32, %arg1: i32, %arg2: memref<96x128xi8, #tpu.memory_space<vmem>>, %arg3: memref<128x32xbf16, #tpu.memory_space<vmem>>, %arg4: memref<96x32xbf16, #tpu.memory_space<vmem>>, %arg5: memref<32x128xbf16, #tpu.memory_space<vmem>>, %arg6: memref<96x128xf32, #tpu.memory_space<vmem>>, %arg7: memref<96x128xf32, #tpu.memory_space<vmem>>) attributes {dimension_semantics = [#tpu.dimension_semantics<parallel>, #tpu.dimension_semantics<arbitrary>], iteration_bounds = array<i64: 4, 3>, scalar_prefetch = 0 : i64, scratch_operands = 1 : i64, tpu.core_type = #tpu.core_type<tc>, window_params = [{transform_indices = @transform_0, window_bounds = array<i64: 96, 128>}, {transform_indices = @transform_1, window_bounds = array<i64: 128, 32>}, {transform_indices = @transform_2, window_bounds = array<i64: 96, 32>}, {pipeline_mode = #tpu.pipeline_mode<synchronous>, transform_indices = @transform_3, window_bounds = array<i64: 32, 128>}, {transform_indices = @transform_4, window_bounds = array<i64: 96, 128>}]} {
    %c0_i32 = arith.constant 0 : i32
    %0 = arith.cmpi eq, %arg1, %c0_i32 : i32
    %1 = arith.extui %0 : i1 to i32
    %c0_i32_0 = arith.constant 0 : i32
    %2 = arith.cmpi ne, %1, %c0_i32_0 : i32
    scf.if %2 {
      %c0_12 = arith.constant 0 : index
      %c0_13 = arith.constant 0 : index
      %17 = vector.load %arg4[%c0_12, %c0_13] : memref<96x32xbf16, #tpu.memory_space<vmem>>, vector<96x32xbf16>
      %c0_14 = arith.constant 0 : index
      %c0_15 = arith.constant 0 : index
      %18 = vector.load %arg5[%c0_14, %c0_15] : memref<32x128xbf16, #tpu.memory_space<vmem>>, vector<32x128xbf16>
      %cst_16 = arith.constant dense<0.000000e+00> : vector<96x128xf32>
      %19 = tpu.matmul %17, %18, %cst_16 {dimension_numbers = #tpu.dot_dimension_numbers<[1], [0], [0], [1], [0, 0, 1, 1], [], []>} : vector<96x32xbf16>, vector<32x128xbf16>, vector<96x128xf32> -> vector<96x128xf32>
      %cst_17 = arith.constant 1.500000e+00 : f32
      %20 = vector.broadcast %cst_17 : f32 to vector<96x128xf32>
      %21 = arith.mulf %20, %19 : vector<96x128xf32>
      %c0_18 = arith.constant 0 : index
      %c0_19 = arith.constant 0 : index
      %22 = vector.load %arg7[%c0_18, %c0_19] : memref<96x128xf32, #tpu.memory_space<vmem>>, vector<96x128xf32>
      tpu.vector_store %arg7[%c0_18, %c0_19], %21 {strides = array<i32>} : memref<96x128xf32, #tpu.memory_space<vmem>>, vector<96x128xf32>,
    } else {
    }
    %c0 = arith.constant 0 : index
    %c0_1 = arith.constant 0 : index
    %3 = vector.load %arg3[%c0, %c0_1] : memref<128x32xbf16, #tpu.memory_space<vmem>>, vector<128x32xbf16>
    %c0_2 = arith.constant 0 : index
    %c0_3 = arith.constant 0 : index
    %4 = vector.load %arg5[%c0_2, %c0_3] : memref<32x128xbf16, #tpu.memory_space<vmem>>, vector<32x128xbf16>
    %cst = arith.constant dense<0.000000e+00> : vector<128x128xf32>
    %5 = tpu.matmul %3, %4, %cst {dimension_numbers = #tpu.dot_dimension_numbers<[1], [0], [0], [1], [0, 0, 1, 1], [], []>} : vector<128x32xbf16>, vector<32x128xbf16>, vector<128x128xf32> -> vector<128x128xf32>
    %c0_4 = arith.constant 0 : index
    %c0_5 = arith.constant 0 : index
    %6 = vector.load %arg2[%c0_4, %c0_5] : memref<96x128xi8, #tpu.memory_space<vmem>>, vector<96x128xi8>
    %7 = arith.sitofp %6 : vector<96x128xi8> to vector<96x128xf32>
    %8 = arith.truncf %7 : vector<96x128xf32> to vector<96x128xbf16>
    %c0_6 = arith.constant 0 : index
    %c0_7 = arith.constant 0 : index
    %9 = vector.load %arg7[%c0_6, %c0_7] : memref<96x128xf32, #tpu.memory_space<vmem>>, vector<96x128xf32>
    %10 = arith.truncf %5 : vector<128x128xf32> to vector<128x128xbf16>
    %cst_8 = arith.constant dense<0.000000e+00> : vector<96x128xf32>
    %11 = tpu.matmul %8, %10, %cst_8 {dimension_numbers = #tpu.dot_dimension_numbers<[1], [0], [0], [1], [0, 0, 1, 1], [], []>} : vector<96x128xbf16>, vector<128x128xbf16>, vector<96x128xf32> -> vector<96x128xf32>
    %12 = arith.addf %9, %11 : vector<96x128xf32>
    %c0_9 = arith.constant 0 : index
    %c0_10 = arith.constant 0 : index
    %13 = vector.load %arg7[%c0_9, %c0_10] : memref<96x128xf32, #tpu.memory_space<vmem>>, vector<96x128xf32>
    tpu.vector_store %arg7[%c0_9, %c0_10], %12 {strides = array<i32>} : memref<96x128xf32, #tpu.memory_space<vmem>>, vector<96x128xf32>,
    %c2_i32 = arith.constant 2 : i32
    %14 = arith.cmpi eq, %arg1, %c2_i32 : i32
    %15 = arith.extui %14 : i1 to i32
    %c0_i32_11 = arith.constant 0 : i32
    %16 = arith.cmpi ne, %15, %c0_i32_11 : i32
    scf.if %16 {
      %c0_12 = arith.constant 0 : index
      %c0_13 = arith.constant 0 : index
      %17 = vector.load %arg7[%c0_12, %c0_13] : memref<96x128xf32, #tpu.memory_space<vmem>>, vector<96x128xf32>
      %c0_14 = arith.constant 0 : index
      %c0_15 = arith.constant 0 : index
      %18 = vector.load %arg6[%c0_14, %c0_15] : memref<96x128xf32, #tpu.memory_space<vmem>>, vector<96x128xf32>
      tpu.vector_store %arg6[%c0_14, %c0_15], %17 {strides = array<i32>} : memref<96x128xf32, #tpu.memory_space<vmem>>, vector<96x128xf32>,
    } else {
    }
    return
  }
  func.func @transform_0(%arg0: i32, %arg1: i32) -> (i32, i32) {
    %c0_i32 = arith.constant 0 : i32
    return %arg0, %arg1 : i32, i32
  }
  func.func @transform_1(%arg0: i32, %arg1: i32) -> (i32, i32) {
    %c0_i32 = arith.constant 0 : i32
    %c0_i32_0 = arith.constant 0 : i32
    return %arg1, %c0_i32 : i32, i32
  }
  func.func @transform_2(%arg0: i32, %arg1: i32) -> (i32, i32) {
    %c0_i32 = arith.constant 0 : i32
    %c0_i32_0 = arith.constant 0 : i32
    return %arg0, %c0_i32 : i32, i32
  }
  func.func @transform_3(%arg0: i32, %arg1: i32) -> (i32, i32) {
    %c0_i32 = arith.constant 0 : i32
    %c0_i32_0 = arith.constant 0 : i32
    %c0_i32_1 = arith.constant 0 : i32
    return %c0_i32, %c0_i32_0 : i32, i32
  }
  func.func @transform_4(%arg0: i32, %arg1: i32) -> (i32, i32) {
    %c0_i32 = arith.constant 0 : i32
    %c0_i32_0 = arith.constant 0 : i32
    return %arg0, %c0_i32 : i32, i32
  }
}

</mosaic_0001>

<llo_original>
// kernel: tpu_custom_call.1
$region0: #{tpu_custom_call.1}
  #allocation0 [shape = 'u32[]', space=smem, size = 0x4, offset = 0x4, fixed_abs, tag = 'smem constant byte address 0x4 - core index']
  #allocation1 [shape = 'u32[72,128]{1,0:T(1,128)}', space=vmem, size = 0x9000, scoped, tag = 'internal scratch']
  #allocation2 [shape = 'f32[96,128]{1,0:T(8,128)}', space=vmem, size = 0xc000, scoped, tag = 'scratch operand']
  %s0 = inlined_call_operand.vmem [shape: s8[384,384], index: 0, kind: input, shape index: {}]
  %s1 = inlined_call_operand.vmem [shape: bf16[384,32], index: 1, kind: input, shape index: {}]
  %s2 = inlined_call_operand.vmem [shape: bf16[384,32], index: 2, kind: input, shape index: {}]
  %s3 = inlined_call_operand.vmem [shape: bf16[32,128], index: 3, kind: input, shape index: {}]
  %s4 = inlined_call_operand.hbm [shape: f32[384,128], index: 4, kind: output, shape index: {}]
  %s5 = sld [smem:[#allocation0]]
  $region95: #{tpu_custom_call.1} parent=0
    _
  %s7 = ssub.s32 1, %s5
  %s8 = scalar_select 0, %s7, %s5
  $region1: #{tpu_custom_call.1} parent=0
    #allocation3 [shape = 'u8[24576]{0}', space=vmem, size = 0x6000, scoped, tag = 'input window, operand 0']
    #allocation4 [shape = 'u8[98304]{0}', space=vmem, size = 0x18000, scoped, tag = 'output window, operand 0']
    #allocation5 [shape = 's32[2]{0}', space=sflag, size = 0x8, scoped, tag = 'scoped memory for tpu_custom_call.1']
    %9 = vsyncpa [#allocation5], 0
    %s10 = scalar_lea.sflag [#allocation5], 1
    %11 = vsyncpa %s10, 0
    loop: start=0, step=1, limit=14
    $region2: #{tpu_custom_call.1} parent=1 // loop_pre_header
      _
    $region3: #{tpu_custom_call.1} parent=1 // loop_header
      %s13 = sphi 0, %s17
      %p14 = scmp.ge.s32.totalorder %s13, 14
      %s20 = sphi 0, %s32
      %s21 = sphi 0, %s28
      %s22 = sphi 0, %s20
      %s23 = sphi 0, %s21
      %s24 = sphi 0, %s22
      %s25 = sphi 0, %s23
      %s37 = sphi 0, %s39
      %s40 = sphi 0, %s37
      %s41 = sphi 0, %s40
      %s57 = sphi 0, %s41
      %s63 = sphi 0, %s65
      %s66 = sphi 0, %s63
      %s67 = sphi 0, %s66
      %s83 = sphi 0, %s67
      %s89 = sphi 0, %s91
      %s92 = sphi 0, %s89
      %s93 = sphi 0, %s92
      %s109 = sphi 0, %s93
      %s113 = sphi 0, %s113
      %s115 = sphi 0, %s113
      %s116 = sphi 0, %s115
      %s130 = sphi 0, %s116
      %s136 = sphi 0, %s138
      %s139 = sphi 0, %s136
      %s140 = sphi 0, %s139
      %s156 = sphi 0, %s140
    $region4: #{tpu_custom_call.1} parent=1 // loop_header_branch
      %16 = sbr.rel (%p14) target = $region8
    $region5: #{tpu_custom_call.1} parent=1 // loop_body
      %s18 = ssub.s32 %s13, 1
      %s19 = ssub.s32 %s13, 2
      %s26 = sadd.s32 1, %s21
      %p27 = scmp.ge.s32.totalorder %s26, 3
      %s28 = scalar_select %p27, 0, %s26
      %s29 = sadd.s32 1, %s20
      %s30 = scalar_select %p27, %s29, %s20
      %p31 = scmp.ge.s32.totalorder %s30, 4
      %s32 = scalar_select %p31, 0, %s30
      %s33 = ssub.s32 %s20, %s32
      %s34 = ssub.s32 %s21, %s28
      %s35 = sor.u32 %s33, %s34
      %p36 = scmp.eq.s32.totalorder %s35, 0
      %s38 = sadd.s32 %s37, 1
      %s39 = scalar_select %p36, %s37, %s38
      %p42 = pneg %p36
      %p43 = scmp.eq.s32.totalorder %s13, 11
      %p44 = por %p42, %p43
      %p45 = scmp.ne.s32.totalorder %s37, %s40
      %p46 = scmp.eq.s32.totalorder %s13, 0
      %p47 = por %p45, %p46
      %p48 = scmp.ne.s32.totalorder %s37, %s40
      %p49 = scmp.eq.s32.totalorder %s18, 11
      %p50 = por %p48, %p49
      %p51 = scmp.ne.s32.totalorder %s40, %s41
      %p52 = scmp.eq.s32.totalorder %s18, 0
      %p53 = por %p51, %p52
      %p54 = scmp.ne.s32.totalorder %s40, %s41
      %p55 = scmp.eq.s32.totalorder %s19, 11
      %p56 = por %p54, %p55
      %p58 = scmp.ne.s32.totalorder %s41, %s57
      %p59 = scmp.eq.s32.totalorder %s19, 0
      %p60 = por %p58, %p59
      %s61 = ssub.s32 %s21, %s28
      %p62 = scmp.eq.s32.totalorder %s61, 0
      %s64 = sadd.s32 %s63, 1
      %s65 = scalar_select %p62, %s63, %s64
      %p68 = pneg %p62
      %p69 = scmp.eq.s32.totalorder %s13, 11
      %p70 = por %p68, %p69
      %p71 = scmp.ne.s32.totalorder %s63, %s66
      %p72 = scmp.eq.s32.totalorder %s13, 0
      %p73 = por %p71, %p72
      %p74 = scmp.ne.s32.totalorder %s63, %s66
      %p75 = scmp.eq.s32.totalorder %s18, 11
      %p76 = por %p74, %p75
      %p77 = scmp.ne.s32.totalorder %s66, %s67
      %p78 = scmp.eq.s32.totalorder %s18, 0
      %p79 = por %p77, %p78
      %p80 = scmp.ne.s32.totalorder %s66, %s67
      %p81 = scmp.eq.s32.totalorder %s19, 11
      %p82 = por %p80, %p81
      %p84 = scmp.ne.s32.totalorder %s67, %s83
      %p85 = scmp.eq.s32.totalorder %s19, 0
      %p86 = por %p84, %p85
      %s87 = ssub.s32 %s20, %s32
      %p88 = scmp.eq.s32.totalorder %s87, 0
      %s90 = sadd.s32 %s89, 1
      %s91 = scalar_select %p88, %s89, %s90
      %p94 = pneg %p88
      %p95 = scmp.eq.s32.totalorder %s13, 11
      %p96 = por %p94, %p95
      %p97 = scmp.ne.s32.totalorder %s89, %s92
      %p98 = scmp.eq.s32.totalorder %s13, 0
      %p99 = por %p97, %p98
      %p100 = scmp.ne.s32.totalorder %s89, %s92
      %p101 = scmp.eq.s32.totalorder %s18, 11
      %p102 = por %p100, %p101
      %p103 = scmp.ne.s32.totalorder %s92, %s93
      %p104 = scmp.eq.s32.totalorder %s18, 0
      %p105 = por %p103, %p104
      %p106 = scmp.ne.s32.totalorder %s92, %s93
      %p107 = scmp.eq.s32.totalorder %s19, 11
      %p108 = por %p106, %p107
      %p110 = scmp.ne.s32.totalorder %s93, %s109
      %p111 = scmp.eq.s32.totalorder %s19, 0
      %p112 = por %p110, %p111
      %s114 = sadd.s32 %s113, 1
      %p117 = scmp.eq.s32.totalorder %s13, 11
      %p118 = scmp.ne.s32.totalorder %s113, %s115
      %p119 = scmp.eq.s32.totalorder %s13, 0
      %p120 = por %p118, %p119
      %p121 = scmp.ne.s32.totalorder %s113, %s115
      %p122 = scmp.eq.s32.totalorder %s18, 11
      %p123 = por %p121, %p122
      %p124 = scmp.ne.s32.totalorder %s115, %s116
      %p125 = scmp.eq.s32.totalorder %s18, 0
      %p126 = por %p124, %p125
      %p127 = scmp.ne.s32.totalorder %s115, %s116
      %p128 = scmp.eq.s32.totalorder %s19, 11
      %p129 = por %p127, %p128
      %p131 = scmp.ne.s32.totalorder %s116, %s130
      %p132 = scmp.eq.s32.totalorder %s19, 0
      %p133 = por %p131, %p132
      %s134 = ssub.s32 %s20, %s32
      %p135 = scmp.eq.s32.totalorder %s134, 0
      %s137 = sadd.s32 %s136, 1
      %s138 = scalar_select %p135, %s136, %s137
      %p141 = pneg %p135
      %p142 = scmp.eq.s32.totalorder %s13, 11
      %p143 = por %p141, %p142
      %p144 = scmp.ne.s32.totalorder %s136, %s139
      %p145 = scmp.eq.s32.totalorder %s13, 0
      %p146 = por %p144, %p145
      %p147 = scmp.ne.s32.totalorder %s136, %s139
      %p148 = scmp.eq.s32.totalorder %s18, 11
      %p149 = por %p147, %p148
      %p150 = scmp.ne.s32.totalorder %s139, %s140
      %p151 = scmp.eq.s32.totalorder %s18, 0
      %p152 = por %p150, %p151
      %p153 = scmp.ne.s32.totalorder %s139, %s140
      %p154 = scmp.eq.s32.totalorder %s19, 11
      %p155 = por %p153, %p154
      %p157 = scmp.ne.s32.totalorder %s140, %s156
      %p158 = scmp.eq.s32.totalorder %s19, 0
      %p159 = por %p157, %p158
      %p160 = scmp.le.s32.totalorder 1, %s13
      %p161 = scmp.lt.s32.totalorder %s13, 13
      %p162 = pnand %p160, %p161
      %p163 = pneg %p162
      // Predicated region
      $region9: #{tpu_custom_call.1} parent=5 // pred_check
        _
      $region10: #{tpu_custom_call.1} parent=5 // pred_check_branch
        %165 = sbr.rel (%p162) target = $region12
      $region11: #{tpu_custom_call.1} parent=5 // pred_region
        %s166 = ssub.s32 %s13, 1
        // Predicated region
        $region13: #{tpu_custom_call.1} parent=11 // pred_check
          %p167 = pneg %p126
        $region14: #{tpu_custom_call.1} parent=11 // pred_check_branch
          %169 = sbr.rel (%p167) target = $region16
        $region15: #{tpu_custom_call.1} parent=11 // pred_region
          _
        $region16: #{tpu_custom_call.1} parent=11 // pred_fallthru
          _
      $region12: #{tpu_custom_call.1} parent=5 // pred_fallthru
        _
      %p170 = scmp.lt.s32.totalorder %s13, 12
      // Predicated region
      $region17: #{tpu_custom_call.1} parent=5 // pred_check
        %p171 = pneg %p170
      $region18: #{tpu_custom_call.1} parent=5 // pred_check_branch
        %173 = sbr.rel (%p171) target = $region20
      $region19: #{tpu_custom_call.1} parent=5 // pred_region
        // Predicated region
        $region21: #{tpu_custom_call.1} parent=19 // pred_check
          %p174 = pneg %p47
        $region22: #{tpu_custom_call.1} parent=19 // pred_check_branch
          %176 = sbr.rel (%p174) target = $region24
        $region23: #{tpu_custom_call.1} parent=19 // pred_region
          %s177 = sand.u32 %s37, 1
          %s178 = sand.u32 %s37, 1
          %s179 = smul.addr %s178, 24
          %s180 = scalar_lea.vmem [#allocation3], %s179
          %s181 = smul.u32 3, %s20
          %s182 = smul.addr %s181, 3
          %s183 = sadd.s32 %s21, %s182
          %s184 = smul.addr %s183, 8
          %s185 = scalar_lea.vmem %s0, %s184
          // Predicated region
          $region25: #{tpu_custom_call.1} parent=23 // pred_check
            _
          $region26: #{tpu_custom_call.1} parent=23 // pred_check_branch
            %187 = sbr.rel (0) target = $region28
          $region27: #{tpu_custom_call.1} parent=23 // pred_region
            // Predicated region
            $region29: #{tpu_custom_call.1} parent=27 // pred_check
              _
            $region30: #{tpu_custom_call.1} parent=27 // pred_check_branch
              %189 = sbr.rel (0) target = $region32
            $region31: #{tpu_custom_call.1} parent=27 // pred_region
              // Predicated region
              $region44: #{tpu_custom_call.1} parent=31 // pred_check
                _
              $region45: #{tpu_custom_call.1} parent=31 // pred_check_branch
                %209 = sbr.rel (0) target = $region47
              $region46: #{tpu_custom_call.1} parent=31 // pred_region
                loop: start=0, step=1, limit=1
                $region48: #{tpu_custom_call.1} parent=46 // loop_pre_header
                  _
                $region49: #{tpu_custom_call.1} parent=46 // loop_header
                  %s211 = sphi 0, %s215
                  %p212 = scmp.ge.s32.totalorder %s211, 1
                  %s216 = sphi %s185, %s185
                  %s217 = sphi %s180, %s180
                $region50: #{tpu_custom_call.1} parent=46 // loop_header_branch
                  %214 = sbr.rel (%p212) target = $region54
                $region51: #{tpu_custom_call.1} parent=46 // loop_body
                  %v218 = vld [vmem:[%s216] sm:$0xff]
                  %219 = vst [vmem:[%s217] sm:$0xff] %v218
                  %v220 = vld [vmem:[%s216 + $0x18] sm:$0xff]
                  %221 = vst [vmem:[%s217 + $0x8] sm:$0xff] %v220
                  %v222 = vld [vmem:[%s216 + $0x30] sm:$0xff]
                  %223 = vst [vmem:[%s217 + $0x10] sm:$0xff] %v222
                $region52: #{tpu_custom_call.1} parent=46 // loop_footer
                  %s215 = sadd.s32 1, %s211
                $region53: #{tpu_custom_call.1} parent=46 // loop_footer_branch
                  %210 = sbr.rel target = $region49
                $region54: #{tpu_custom_call.1} parent=46 // loop_exit
                  _
              $region47: #{tpu_custom_call.1} parent=31 // pred_fallthru
                _
              // Predicated region
              $region55: #{tpu_custom_call.1} parent=31 // pred_check
                _
              $region56: #{tpu_custom_call.1} parent=31 // pred_check_branch
                %225 = sbr.rel target = $region58
              $region57: #{tpu_custom_call.1} parent=31 // pred_region
                _
              $region58: #{tpu_custom_call.1} parent=31 // pred_fallthru
                _
            $region32: #{tpu_custom_call.1} parent=27 // pred_fallthru
              _
            // Predicated region
            $region33: #{tpu_custom_call.1} parent=27 // pred_check
              _
            $region34: #{tpu_custom_call.1} parent=27 // pred_check_branch
              %191 = sbr.rel target = $region36
            $region35: #{tpu_custom_call.1} parent=27 // pred_region
              %s193 = ssub.s32 256, 1
              loop: start=0, step=1, limit=1
              $region37: #{tpu_custom_call.1} parent=35 // loop_pre_header
                _
              $region38: #{tpu_custom_call.1} parent=35 // loop_header
                %s195 = sphi 0, %s199
                %p196 = scmp.ge.s32.totalorder %s195, 1
                %s200 = sphi %s185, %s185
                %s201 = sphi %s180, %s180
              $region39: #{tpu_custom_call.1} parent=35 // loop_header_branch
                %198 = sbr.rel (%p196) target = $region43
              $region40: #{tpu_custom_call.1} parent=35 // loop_body
                %v202 = vld [vmem:[%s200] sm:%s193]
                %203 = vst [vmem:[%s201] sm:%s193] %v202
                %v204 = vld [vmem:[%s200 + $0x18] sm:%s193]
                %205 = vst [vmem:[%s201 + $0x8] sm:%s193] %v204
                %v206 = vld [vmem:[%s200 + $0x30] sm:%s193]
                %207 = vst [vmem:[%s201 + $0x10] sm:%s193] %v206
              $region41: #{tpu_custom_call.1} parent=35 // loop_footer
                %s199 = sadd.s32 1, %s195
              $region42: #{tpu_custom_call.1} parent=35 // loop_footer_branch
                %194 = sbr.rel target = $region38
              $region43: #{tpu_custom_call.1} parent=35 // loop_exit
                _
            $region36: #{tpu_custom_call.1} parent=27 // pred_fallthru
              _
          $region28: #{tpu_custom_call.1} parent=23 // pred_fallthru
            _
          %226 = vnop
        $region24: #{tpu_custom_call.1} parent=19 // pred_fallthru
          _
        // Predicated region
        $region59: #{tpu_custom_call.1} parent=19 // pred_check
          %p227 = pneg %p73
        $region60: #{tpu_custom_call.1} parent=19 // pred_check_branch
          %229 = sbr.rel (%p227) target = $region62
        $region61: #{tpu_custom_call.1} parent=19 // pred_region
          %s230 = smul.u32 16, %s21
          %p231 = scmp.lt.s32.totalorder %s230, 47
          %s232 = scalar_select %p231, %s230, 47
          %s233 = smul.addr %s232, 4
          %s234 = scalar_lea.vmem %s1, %s233
          %s235 = smul.u32 16, %s21
        $region62: #{tpu_custom_call.1} parent=19 // pred_fallthru
          _
        // Predicated region
        $region63: #{tpu_custom_call.1} parent=19 // pred_check
          %p236 = pneg %p99
        $region64: #{tpu_custom_call.1} parent=19 // pred_check_branch
          %238 = sbr.rel (%p236) target = $region66
        $region65: #{tpu_custom_call.1} parent=19 // pred_region
          %s239 = smul.u32 12, %s20
          %p240 = scmp.lt.s32.totalorder %s239, 47
          %s241 = scalar_select %p240, %s239, 47
          %s242 = smul.addr %s241, 4
          %s243 = scalar_lea.vmem %s2, %s242
          %s244 = smul.u32 12, %s20
        $region66: #{tpu_custom_call.1} parent=19 // pred_fallthru
          _
      $region20: #{tpu_custom_call.1} parent=5 // pred_fallthru
        _
      %p245 = scmp.le.s32.totalorder 1, %s13
      %p246 = scmp.lt.s32.totalorder %s13, 13
      %p247 = pnand %p245, %p246
      %p248 = pneg %p247
      // Predicated region
      $region67: #{tpu_custom_call.1} parent=5 // pred_check
        _
      $region68: #{tpu_custom_call.1} parent=5 // pred_check_branch
        %250 = sbr.rel (%p247) target = $region70
      $region69: #{tpu_custom_call.1} parent=5 // pred_region
        %s251 = ssub.s32 %s13, 1
        %s252 = sand.u32 %s40, 1
        %s253 = sand.u32 %s40, 1
        %s254 = smul.addr %s253, 24
        %s255 = scalar_lea.vmem [#allocation3], %s254
        // Predicated region
        $region71: #{tpu_custom_call.1} parent=69 // pred_check
          %p256 = pneg %p53
        $region72: #{tpu_custom_call.1} parent=69 // pred_check_branch
          %258 = sbr.rel (%p256) target = $region74
        $region73: #{tpu_custom_call.1} parent=69 // pred_region
          _
        $region74: #{tpu_custom_call.1} parent=69 // pred_fallthru
          _
        %s259 = sand.u32 %s40, 1
        %s260 = sand.u32 %s40, 1
        %s261 = smul.addr %s260, 24
        %s262 = scalar_lea.vmem [#allocation3], %s261
        %p263 = pneg %p53
        %p264 = pneg %p50
        %s265 = smul.u32 16, %s23
        %p266 = scmp.lt.s32.totalorder %s265, 47
        %s267 = scalar_select %p266, %s265, 47
        %s268 = smul.addr %s267, 4
        %s269 = scalar_lea.vmem %s1, %s268
        %p270 = pneg %p79
        %p271 = pneg %p76
        %s272 = smul.u32 12, %s22
        %p273 = scmp.lt.s32.totalorder %s272, 47
        %s274 = scalar_select %p273, %s272, 47
        %s275 = smul.addr %s274, 4
        %s276 = scalar_lea.vmem %s2, %s275
        %p277 = pneg %p105
        %p278 = pneg %p102
        %p279 = pneg %p126
        %p280 = pneg %p123
        %p281 = pneg %p152
        %p282 = pneg %p149
        %s283 = sand.u32 %s139, 1
        %s284 = scalar_lea.sflag [#allocation5], %s283
        %s285 = sand.u32 %s139, 1
        %s286 = smul.addr %s285, 96
        %s287 = scalar_lea.vmem [#allocation4], %s286
        %s288 = smul.u32 3, %s22
        %s289 = smul.u32 16, %s23
        %p290 = scmp.lt.s32.totalorder %s289, 47
        %s291 = scalar_select %p290, %s289, 47
        %s292 = smul.addr %s291, 4
        %s293 = scalar_lea.vmem %s1, %s292
        %s294 = smul.u32 16, %s23
        %s295 = smul.u32 12, %s22
        %p296 = scmp.lt.s32.totalorder %s295, 47
        %s297 = scalar_select %p296, %s295, 47
        %s298 = smul.addr %s297, 4
        %s299 = scalar_lea.vmem %s2, %s298
        %s300 = smul.u32 12, %s22
        %s301 = smul.u32 12, %s22
        %p303 = scmp.eq.s32.totalorder %s23, 0
        // Predicated region
        $region75: #{tpu_custom_call.1} parent=69 // pred_check
          %p304 = pneg %p303
        $region76: #{tpu_custom_call.1} parent=69 // pred_check_branch
          %306 = sbr.rel (%p304) target = $region78
        $region77: #{tpu_custom_call.1} parent=69 // pred_region
          %v307 = vld [vmem:[%s299] sm:$0xf]
          %v308 = vld [vmem:[%s299 + $0x4] sm:$0xf]
          %v309 = vld [vmem:[%s299 + $0x8] sm:$0xf]
          %v310 = vld [vmem:[%s299 + $0xc] sm:$0xf]
          %v311 = vld [vmem:[%s299 + $0x10] sm:$0xf]
          %v312 = vld [vmem:[%s299 + $0x14] sm:$0xf]
          %v313 = vld [vmem:[%s299 + $0x18] sm:$0xf]
          %v314 = vld [vmem:[%s299 + $0x1c] sm:$0xf]
          %v315 = vld [vmem:[%s299 + $0x20] sm:$0xf]
          %v316 = vld [vmem:[%s299 + $0x24] sm:$0xf]
          %v317 = vld [vmem:[%s299 + $0x28] sm:$0xf]
          %v318 = vld [vmem:[%s299 + $0x2c] sm:$0xf]
          %v319 = vld [vmem:[%s3] sm:$0xf]
          %v320 = vld [vmem:[%s3 + $0x4] sm:$0xf]
          %v321 = vld [vmem:[%s3 + $0x8] sm:$0xf]
          %v322 = vld [vmem:[%s3 + $0xc] sm:$0xf]
          %v335 = vunpack.c.l.b16 %v307
          %v336 = vunpack.c.l.b16 %v308
          %v337 = vunpack.c.l.b16 %v309
          %v338 = vunpack.c.l.b16 %v310
          %v339 = vunpack.c.l.b16 %v311
          %v340 = vunpack.c.l.b16 %v312
          %v341 = vunpack.c.l.b16 %v313
          %v342 = vunpack.c.l.b16 %v314
          %v343 = vunpack.c.l.b16 %v315
          %v344 = vunpack.c.l.b16 %v316
          %v345 = vunpack.c.l.b16 %v317
          %v346 = vunpack.c.l.b16 %v318
          %v347 = vpack.c.b16 %v336, %v335
          %v348 = vpack.c.b16 %v338, %v337
          %v349 = vpack.c.b16 %v340, %v339
          %v350 = vpack.c.b16 %v342, %v341
          %v351 = vpack.c.b16 %v344, %v343
          %v352 = vpack.c.b16 %v346, %v345
          %v357 = vunpack.c.l.b16 %v319
          %v358 = vunpack.c.l.b16 %v320
          %v359 = vunpack.c.l.b16 %v321
          %v360 = vunpack.c.l.b16 %v322
          %v361 = vpack.c.b16 %v358, %v357
          %v362 = vpack.c.b16 %v360, %v359
          %vm365 = vcmask 261120
          %v367 = vsel %vm365, %v347, 0
          %v370 = vsel %vm365, %v348, 0
          %v373 = vsel %vm365, %v349, 0
          %v376 = vsel %vm365, %v350, 0
          %v379 = vsel %vm365, %v351, 0
          %v382 = vsel %vm365, %v352, 0
          %384 = vmatpush.bf16.msra.mxu0 0
          %385 = vmatpush.bf16.msra.mxu0 0
          %386 = vmatpush.bf16.msra.mxu0 0
          %387 = vmatpush.bf16.msra.mxu0 0
          %388 = vmatpush.bf16.msra.mxu0 0
          %389 = vmatpush.bf16.msra.mxu0 0
          %390 = vmatpush.bf16.msra.mxu0 %v362
          %391 = vmatpush.bf16.msra.mxu0 %v361
          %392 = vmatmul.bf16.gmra.mxu0 %v367
          %v393 = vpop.f32.mrf.mxu0
          %v394 = vadd.f32 0.0, %v393
          %v395 = vpop.f32.mrf.mxu0
          %v396 = vadd.f32 0.0, %v395
          %397 = vmatmul.bf16.gmra.mxu0 %v370
          %v398 = vpop.f32.mrf.mxu0
          %v399 = vadd.f32 0.0, %v398
          %v400 = vpop.f32.mrf.mxu0
          %v401 = vadd.f32 0.0, %v400
          %402 = vmatmul.bf16.gmra.mxu0 %v373
          %v403 = vpop.f32.mrf.mxu0
          %v404 = vadd.f32 0.0, %v403
          %v405 = vpop.f32.mrf.mxu0
          %v406 = vadd.f32 0.0, %v405
          %407 = vmatmul.bf16.gmra.mxu0 %v376
          %v408 = vpop.f32.mrf.mxu0
          %v409 = vadd.f32 0.0, %v408
          %v410 = vpop.f32.mrf.mxu0
          %v411 = vadd.f32 0.0, %v410
          %412 = vmatmul.bf16.gmra.mxu0 %v379
          %v413 = vpop.f32.mrf.mxu0
          %v414 = vadd.f32 0.0, %v413
          %v415 = vpop.f32.mrf.mxu0
          %v416 = vadd.f32 0.0, %v415
          %417 = vmatmul.bf16.gmra.mxu0 %v382
          %v418 = vpop.f32.mrf.mxu0
          %v419 = vadd.f32 0.0, %v418
          %v420 = vpop.f32.mrf.mxu0
          %v421 = vadd.f32 0.0, %v420
          %422 = vdwg.mxu0
          %v423 = vmul.f32 %v394, 1.5
          %v424 = vmul.f32 %v396, 1.5
          %v425 = vmul.f32 %v399, 1.5
          %v426 = vmul.f32 %v401, 1.5
          %v427 = vmul.f32 %v404, 1.5
          %v428 = vmul.f32 %v406, 1.5
          %v429 = vmul.f32 %v409, 1.5
          %v430 = vmul.f32 %v411, 1.5
          %v431 = vmul.f32 %v414, 1.5
          %v432 = vmul.f32 %v416, 1.5
          %v433 = vmul.f32 %v419, 1.5
          %v434 = vmul.f32 %v421, 1.5
          %435 = vst [vmem:[#allocation2] sm:$0xff] %v423
          %436 = vst [vmem:[#allocation2 + $0x8] sm:$0xff] %v424
          %437 = vst [vmem:[#allocation2 + $0x10] sm:$0xff] %v425
          %438 = vst [vmem:[#allocation2 + $0x18] sm:$0xff] %v426
          %439 = vst [vmem:[#allocation2 + $0x20] sm:$0xff] %v427
          %440 = vst [vmem:[#allocation2 + $0x28] sm:$0xff] %v428
          %441 = vst [vmem:[#allocation2 + $0x30] sm:$0xff] %v429
          %442 = vst [vmem:[#allocation2 + $0x38] sm:$0xff] %v430
          %443 = vst [vmem:[#allocation2 + $0x40] sm:$0xff] %v431
          %444 = vst [vmem:[#allocation2 + $0x48] sm:$0xff] %v432
          %445 = vst [vmem:[#allocation2 + $0x50] sm:$0xff] %v433
          %446 = vst [vmem:[#allocation2 + $0x58] sm:$0xff] %v434
        $region78: #{tpu_custom_call.1} parent=69 // pred_fallthru
          _
        %v447 = vld [vmem:[%s293] sm:$0xf]
        %v448 = vld [vmem:[%s293 + $0x4] sm:$0xf]
        %v449 = vld [vmem:[%s293 + $0x8] sm:$0xf]
        %v450 = vld [vmem:[%s293 + $0xc] sm:$0xf]
        %v451 = vld [vmem:[%s293 + $0x10] sm:$0xf]
        %v452 = vld [vmem:[%s293 + $0x14] sm:$0xf]
        %v453 = vld [vmem:[%s293 + $0x18] sm:$0xf]
        %v454 = vld [vmem:[%s293 + $0x1c] sm:$0xf]
        %v455 = vld [vmem:[%s293 + $0x20] sm:$0xf]
        %v456 = vld [vmem:[%s293 + $0x24] sm:$0xf]
        %v457 = vld [vmem:[%s293 + $0x28] sm:$0xf]
        %v458 = vld [vmem:[%s293 + $0x2c] sm:$0xf]
        %v459 = vld [vmem:[%s293 + $0x30] sm:$0xf]
        %v460 = vld [vmem:[%s293 + $0x34] sm:$0xf]
        %v461 = vld [vmem:[%s293 + $0x38] sm:$0xf]
        %v462 = vld [vmem:[%s293 + $0x3c] sm:$0xf]
        %v463 = vld [vmem:[%s3] sm:$0xf]
        %v464 = vld [vmem:[%s3 + $0x4] sm:$0xf]
        %v465 = vld [vmem:[%s3 + $0x8] sm:$0xf]
        %v466 = vld [vmem:[%s3 + $0xc] sm:$0xf]
        %v483 = vunpack.c.l.b16 %v447
        %v484 = vunpack.c.l.b16 %v448
        %v485 = vunpack.c.l.b16 %v449
        %v486 = vunpack.c.l.b16 %v450
        %v487 = vunpack.c.l.b16 %v451
        %v488 = vunpack.c.l.b16 %v452
        %v489 = vunpack.c.l.b16 %v453
        %v490 = vunpack.c.l.b16 %v454
        %v491 = vunpack.c.l.b16 %v455
        %v492 = vunpack.c.l.b16 %v456
        %v493 = vunpack.c.l.b16 %v457
        %v494 = vunpack.c.l.b16 %v458
        %v495 = vunpack.c.l.b16 %v459
        %v496 = vunpack.c.l.b16 %v460
        %v497 = vunpack.c.l.b16 %v461
        %v498 = vunpack.c.l.b16 %v462
        %v499 = vpack.c.b16 %v484, %v483
        %v500 = vpack.c.b16 %v486, %v485
        %v501 = vpack.c.b16 %v488, %v487
        %v502 = vpack.c.b16 %v490, %v489
        %v503 = vpack.c.b16 %v492, %v491
        %v504 = vpack.c.b16 %v494, %v493
        %v505 = vpack.c.b16 %v496, %v495
        %v506 = vpack.c.b16 %v498, %v497
        %v511 = vunpack.c.l.b16 %v463
        %v512 = vunpack.c.l.b16 %v464
        %v513 = vunpack.c.l.b16 %v465
        %v514 = vunpack.c.l.b16 %v466
        %v515 = vpack.c.b16 %v512, %v511
        %v516 = vpack.c.b16 %v514, %v513
        %vm519 = vcmask 261120
        %v521 = vsel %vm519, %v499, 0
        %v524 = vsel %vm519, %v500, 0
        %v527 = vsel %vm519, %v501, 0
        %v530 = vsel %vm519, %v502, 0
        %v533 = vsel %vm519, %v503, 0
        %v536 = vsel %vm519, %v504, 0
        %v539 = vsel %vm519, %v505, 0
        %v542 = vsel %vm519, %v506, 0
        %544 = vmatpush.bf16.msra.mxu0 0
        %545 = vmatpush.bf16.msra.mxu0 0
        %546 = vmatpush.bf16.msra.mxu0 0
        %547 = vmatpush.bf16.msra.mxu0 0
        %548 = vmatpush.bf16.msra.mxu0 0
        %549 = vmatpush.bf16.msra.mxu0 0
        %550 = vmatpush.bf16.msra.mxu0 %v516
        %551 = vmatpush.bf16.msra.mxu0 %v515
        %552 = vmatmul.bf16.gmra.mxu0 %v521
        %v553 = vpop.f32.mrf.mxu0
        %v554 = vadd.f32 0.0, %v553
        %v555 = vpop.f32.mrf.mxu0
        %v556 = vadd.f32 0.0, %v555
        %557 = vmatmul.bf16.gmra.mxu0 %v524
        %v558 = vpop.f32.mrf.mxu0
        %v559 = vadd.f32 0.0, %v558
        %v560 = vpop.f32.mrf.mxu0
        %v561 = vadd.f32 0.0, %v560
        %562 = vmatmul.bf16.gmra.mxu0 %v527
        %v563 = vpop.f32.mrf.mxu0
        %v564 = vadd.f32 0.0, %v563
        %v565 = vpop.f32.mrf.mxu0
        %v566 = vadd.f32 0.0, %v565
        %567 = vmatmul.bf16.gmra.mxu0 %v530
        %v568 = vpop.f32.mrf.mxu0
        %v569 = vadd.f32 0.0, %v568
        %v570 = vpop.f32.mrf.mxu0
        %v571 = vadd.f32 0.0, %v570
        %572 = vmatmul.bf16.gmra.mxu0 %v533
        %v573 = vpop.f32.mrf.mxu0
        %v574 = vadd.f32 0.0, %v573
        %v575 = vpop.f32.mrf.mxu0
        %v576 = vadd.f32 0.0, %v575
        %577 = vmatmul.bf16.gmra.mxu0 %v536
        %v578 = vpop.f32.mrf.mxu0
        %v579 = vadd.f32 0.0, %v578
        %v580 = vpop.f32.mrf.mxu0
        %v581 = vadd.f32 0.0, %v580
        %582 = vmatmul.bf16.gmra.mxu0 %v539
        %v583 = vpop.f32.mrf.mxu0
        %v584 = vadd.f32 0.0, %v583
        %v585 = vpop.f32.mrf.mxu0
        %v586 = vadd.f32 0.0, %v585
        %587 = vmatmul.bf16.gmra.mxu0 %v542
        %v588 = vpop.f32.mrf.mxu0
        %v589 = vadd.f32 0.0, %v588
        %v590 = vpop.f32.mrf.mxu0
        %v591 = vadd.f32 0.0, %v590
        %592 = vdwg.mxu0
        %v593 = vld [vmem:[%s255] sm:$0xff]
        %v594 = vld [vmem:[%s255 + $0x8] sm:$0xff]
        %v595 = vld [vmem:[%s255 + $0x10] sm:$0xff]
        %v596 = vunpack.c.0.s8 %v593
        %v597 = vunpack.c.1.s8 %v593
        %v598 = vunpack.c.2.s8 %v593
        %v599 = vunpack.c.3.s8 %v593
        %v600 = vunpack.c.0.s8 %v594
        %v601 = vunpack.c.1.s8 %v594
        %v602 = vunpack.c.2.s8 %v594
        %v603 = vunpack.c.3.s8 %v594
        %v604 = vunpack.c.0.s8 %v595
        %v605 = vunpack.c.1.s8 %v595
        %v606 = vunpack.c.2.s8 %v595
        %v607 = vunpack.c.3.s8 %v595
        %v608 = vcvt.s32.f32 %v596
        %v609 = vcvt.s32.f32 %v597
        %v610 = vcvt.s32.f32 %v598
        %v611 = vcvt.s32.f32 %v599
        %v612 = vcvt.s32.f32 %v600
        %v613 = vcvt.s32.f32 %v601
        %v614 = vcvt.s32.f32 %v602
        %v615 = vcvt.s32.f32 %v603
        %v616 = vcvt.s32.f32 %v604
        %v617 = vcvt.s32.f32 %v605
        %v618 = vcvt.s32.f32 %v606
        %v619 = vcvt.s32.f32 %v607
        %v620 = vpack.c.bf16 %v609, %v608
        %v621 = vpack.c.bf16 %v611, %v610
        %v622 = vpack.c.bf16 %v613, %v612
        %v623 = vpack.c.bf16 %v615, %v614
        %v624 = vpack.c.bf16 %v617, %v616
        %v625 = vpack.c.bf16 %v619, %v618
        %v626 = vld [vmem:[#allocation2] sm:$0xff]
        %v627 = vld [vmem:[#allocation2 + $0x8] sm:$0xff]
        %v628 = vld [vmem:[#allocation2 + $0x10] sm:$0xff]
        %v629 = vld [vmem:[#allocation2 + $0x18] sm:$0xff]
        %v630 = vld [vmem:[#allocation2 + $0x20] sm:$0xff]
        %v631 = vld [vmem:[#allocation2 + $0x28] sm:$0xff]
        %v632 = vld [vmem:[#allocation2 + $0x30] sm:$0xff]
        %v633 = vld [vmem:[#allocation2 + $0x38] sm:$0xff]
        %v634 = vld [vmem:[#allocation2 + $0x40] sm:$0xff]
        %v635 = vld [vmem:[#allocation2 + $0x48] sm:$0xff]
        %v636 = vld [vmem:[#allocation2 + $0x50] sm:$0xff]
        %v637 = vld [vmem:[#allocation2 + $0x58] sm:$0xff]
        %v638 = vpack.c.bf16 %v556, %v554
        %v639 = vpack.c.bf16 %v561, %v559
        %v640 = vpack.c.bf16 %v566, %v564
        %v641 = vpack.c.bf16 %v571, %v569
        %v642 = vpack.c.bf16 %v576, %v574
        %v643 = vpack.c.bf16 %v581, %v579
        %v644 = vpack.c.bf16 %v586, %v584
        %v645 = vpack.c.bf16 %v591, %v589
        %646 = vmatpush.bf16.msra.mxu0 %v645
        %647 = vmatpush.bf16.msra.mxu0 %v644
        %648 = vmatpush.bf16.msra.mxu0 %v643
        %649 = vmatpush.bf16.msra.mxu0 %v642
        %650 = vmatpush.bf16.msra.mxu0 %v641
        %651 = vmatpush.bf16.msra.mxu0 %v640
        %652 = vmatpush.bf16.msra.mxu0 %v639
        %653 = vmatpush.bf16.msra.mxu0 %v638
        %654 = vmatmul.bf16.gmra.mxu0 %v620
        %v655 = vpop.f32.mrf.mxu0
        %v656 = vadd.f32 0.0, %v655
        %v657 = vpop.f32.mrf.mxu0
        %v658 = vadd.f32 0.0, %v657
        %659 = vmatmul.bf16.gmra.mxu0 %v621
        %v660 = vpop.f32.mrf.mxu0
        %v661 = vadd.f32 0.0, %v660
        %v662 = vpop.f32.mrf.mxu0
        %v663 = vadd.f32 0.0, %v662
        %664 = vmatmul.bf16.gmra.mxu0 %v622
        %v665 = vpop.f32.mrf.mxu0
        %v666 = vadd.f32 0.0, %v665
        %v667 = vpop.f32.mrf.mxu0
        %v668 = vadd.f32 0.0, %v667
        %669 = vmatmul.bf16.gmra.mxu0 %v623
        %v670 = vpop.f32.mrf.mxu0
        %v671 = vadd.f32 0.0, %v670
        %v672 = vpop.f32.mrf.mxu0
        %v673 = vadd.f32 0.0, %v672
        %674 = vmatmul.bf16.gmra.mxu0 %v624
        %v675 = vpop.f32.mrf.mxu0
        %v676 = vadd.f32 0.0, %v675
        %v677 = vpop.f32.mrf.mxu0
        %v678 = vadd.f32 0.0, %v677
        %679 = vmatmul.bf16.gmra.mxu0 %v625
        %v680 = vpop.f32.mrf.mxu0
        %v681 = vadd.f32 0.0, %v680
        %v682 = vpop.f32.mrf.mxu0
        %v683 = vadd.f32 0.0, %v682
        %684 = vdwg.mxu0
        %v685 = vadd.f32 %v626, %v656
        %v686 = vadd.f32 %v627, %v658
        %v687 = vadd.f32 %v628, %v661
        %v688 = vadd.f32 %v629, %v663
        %v689 = vadd.f32 %v630, %v666
        %v690 = vadd.f32 %v631, %v668
        %v691 = vadd.f32 %v632, %v671
        %v692 = vadd.f32 %v633, %v673
        %v693 = vadd.f32 %v634, %v676
        %v694 = vadd.f32 %v635, %v678
        %v695 = vadd.f32 %v636, %v681
        %v696 = vadd.f32 %v637, %v683
        %697 = vst [vmem:[#allocation2] sm:$0xff] %v685
        %698 = vst [vmem:[#allocation2 + $0x8] sm:$0xff] %v686
        %699 = vst [vmem:[#allocation2 + $0x10] sm:$0xff] %v687
        %700 = vst [vmem:[#allocation2 + $0x18] sm:$0xff] %v688
        %701 = vst [vmem:[#allocation2 + $0x20] sm:$0xff] %v689
        %702 = vst [vmem:[#allocation2 + $0x28] sm:$0xff] %v690
        %703 = vst [vmem:[#allocation2 + $0x30] sm:$0xff] %v691
        %704 = vst [vmem:[#allocation2 + $0x38] sm:$0xff] %v692
        %705 = vst [vmem:[#allocation2 + $0x40] sm:$0xff] %v693
        %706 = vst [vmem:[#allocation2 + $0x48] sm:$0xff] %v694
        %707 = vst [vmem:[#allocation2 + $0x50] sm:$0xff] %v695
        %708 = vst [vmem:[#allocation2 + $0x58] sm:$0xff] %v696
        %p709 = scmp.eq.s32.totalorder %s23, 2
        // Predicated region
        $region79: #{tpu_custom_call.1} parent=69 // pred_check
          %p710 = pneg %p709
        $region80: #{tpu_custom_call.1} parent=69 // pred_check_branch
          %712 = sbr.rel (%p710) target = $region82
        $region81: #{tpu_custom_call.1} parent=69 // pred_region
          %v713 = vld [vmem:[#allocation2] sm:$0xff]
          %v714 = vld [vmem:[#allocation2 + $0x8] sm:$0xff]
          %v715 = vld [vmem:[#allocation2 + $0x10] sm:$0xff]
          %v716 = vld [vmem:[#allocation2 + $0x18] sm:$0xff]
          %v717 = vld [vmem:[#allocation2 + $0x20] sm:$0xff]
          %v718 = vld [vmem:[#allocation2 + $0x28] sm:$0xff]
          %v719 = vld [vmem:[#allocation2 + $0x30] sm:$0xff]
          %v720 = vld [vmem:[#allocation2 + $0x38] sm:$0xff]
          %v721 = vld [vmem:[#allocation2 + $0x40] sm:$0xff]
          %v722 = vld [vmem:[#allocation2 + $0x48] sm:$0xff]
          %v723 = vld [vmem:[#allocation2 + $0x50] sm:$0xff]
          %v724 = vld [vmem:[#allocation2 + $0x58] sm:$0xff]
          %725 = vst [vmem:[%s287] sm:$0xff] %v713
          %726 = vst [vmem:[%s287 + $0x8] sm:$0xff] %v714
          %727 = vst [vmem:[%s287 + $0x10] sm:$0xff] %v715
          %728 = vst [vmem:[%s287 + $0x18] sm:$0xff] %v716
          %729 = vst [vmem:[%s287 + $0x20] sm:$0xff] %v717
          %730 = vst [vmem:[%s287 + $0x28] sm:$0xff] %v718
          %731 = vst [vmem:[%s287 + $0x30] sm:$0xff] %v719
          %732 = vst [vmem:[%s287 + $0x38] sm:$0xff] %v720
          %733 = vst [vmem:[%s287 + $0x40] sm:$0xff] %v721
          %734 = vst [vmem:[%s287 + $0x48] sm:$0xff] %v722
          %735 = vst [vmem:[%s287 + $0x50] sm:$0xff] %v723
          %736 = vst [vmem:[%s287 + $0x58] sm:$0xff] %v724
        $region82: #{tpu_custom_call.1} parent=69 // pred_fallthru
          _
        %s737 = sand.u32 %s139, 1
        %s738 = scalar_lea.sflag [#allocation5], %s737
        %s739 = sand.u32 %s139, 1
        %s740 = smul.addr %s739, 96
        %s741 = scalar_lea.vmem [#allocation4], %s740
        // Predicated region
        $region83: #{tpu_custom_call.1} parent=69 // pred_check
          %p742 = pneg %p149
        $region84: #{tpu_custom_call.1} parent=69 // pred_check_branch
          %744 = sbr.rel (%p742) target = $region86
        $region85: #{tpu_custom_call.1} parent=69 // pred_region
          %s745 = smul.u32 12, %s22
          %747 = vsyncadd %s738, 0
          %s748 = smul.addr %s745, 8
          %s749 = scalar_lea.hbm %s4, %s748
          %s750 = sshll.u32 %s741, 4
          %s751 = int_to_ptr.vmem [resolvable:$true] %s750
          %s752 = sshll.u32 %s749, 4
          %s753 = int_to_ptr.hbm [resolvable:$true] %s752
          %758 = dma.vmem_to_hbm [thread:$0]  %s751, 1536, %s753, %s738, 128, 128, 8
        $region86: #{tpu_custom_call.1} parent=69 // pred_fallthru
          _
      $region70: #{tpu_custom_call.1} parent=5 // pred_fallthru
        _
      %p759 = scmp.le.s32.totalorder 2, %s13
      // Predicated region
      $region87: #{tpu_custom_call.1} parent=5 // pred_check
        %p760 = pneg %p759
      $region88: #{tpu_custom_call.1} parent=5 // pred_check_branch
        %762 = sbr.rel (%p760) target = $region90
      $region89: #{tpu_custom_call.1} parent=5 // pred_region
        %s763 = ssub.s32 %s13, 2
        // Predicated region
        $region91: #{tpu_custom_call.1} parent=89 // pred_check
          %p764 = pneg %p155
        $region92: #{tpu_custom_call.1} parent=89 // pred_check_branch
          %766 = sbr.rel (%p764) target = $region94
        $region93: #{tpu_custom_call.1} parent=89 // pred_region
          %s767 = sand.u32 %s140, 1
          %s768 = scalar_lea.sflag [#allocation5], %s767
          %s769 = sand.u32 %s140, 1
          %s770 = smul.addr %s769, 96
          %s771 = scalar_lea.vmem [#allocation4], %s770
          %773 = dma.done %s768, 1536
        $region94: #{tpu_custom_call.1} parent=89 // pred_fallthru
          _
      $region90: #{tpu_custom_call.1} parent=5 // pred_fallthru
        _
    $region6: #{tpu_custom_call.1} parent=1 // loop_footer
      %s17 = sadd.s32 1, %s13
    $region7: #{tpu_custom_call.1} parent=1 // loop_footer_branch
      %12 = sbr.rel target = $region3
    $region8: #{tpu_custom_call.1} parent=1 // loop_exit
      _
    %774 = vsyncpa [#allocation5], 1
    %s775 = scalar_lea.sflag [#allocation5], 1
    %776 = vsyncpa %s775, 1

</llo_original>
